<compile_context>
chip_gen: v6e
topology: v6e:2x2x1
jax: 0.10.0
libtpu: 0.0.40
codegen_flags: <defaults>
</compile_context>

<pallas_src>
import functools

import numpy as np
import jax
import jax.numpy as jnp
from jax.experimental import pallas as pl
from jax.experimental.pallas import tpu as pltpu


_LANE = 128
_SUBLANE = 8
_TILE_ROWS = 2048          # 2048*128*4B = 1 MiB per f32 block when tiling
_SINGLE_BLOCK_ROWS = 512   # <= 256 KiB f32: run as a single block, grid=(1,)


def _round_up(x, m):
    return ((x + m - 1) // m) * m


def _packing(dtype) -> int:
    # Sub-32-bit dtypes pack along sublanes: f32 -> 1, bf16 -> 2, int8/fp8 -> 4.
    return max(1, 4 // jnp.dtype(dtype).itemsize)


# ---------------------------------------------------------------------------
# Pallas kernel: elementwise threshold mask  (mask = (loss < t).astype(dtype))
# ---------------------------------------------------------------------------
def _threshold_mask_kernel(thresh_ref, loss_ref, out_ref):
    # thresh_ref lives in SMEM (scalar prefetch), shape (1,), f32.
    t = thresh_ref[0]
    out_ref[...] = (loss_ref[...] < t).astype(out_ref.dtype)


@functools.partial(jax.jit, static_argnames=("tile_rows",))
def _threshold_mask_jit(loss, thresh, *, tile_rows):
    orig_shape = loss.shape
    flat = loss.reshape(-1)
    n = flat.shape[0]

    # Pad only to the minimum lane/sublane granularity (<= 1023 f32 elements),
    # never to a full tile; the partial trailing block is handled by Pallas.
    chunk = _SUBLANE * _packing(loss.dtype) * _LANE
    padded_n = _round_up(n, chunk)
    if padded_n != n:
        flat = jnp.pad(flat, (0, padded_n - n))
    rows = padded_n // _LANE
    grid_rows = pl.cdiv(rows, tile_rows)
    loss_2d = flat.reshape(rows, _LANE)

    out_2d = pl.pallas_call(
        _threshold_mask_kernel,
        out_shape=jax.ShapeDtypeStruct((rows, _LANE), loss.dtype),
        grid_spec=pltpu.PrefetchScalarGridSpec(
            num_scalar_prefetch=1,                       # threshold -> SMEM
            grid=(grid_rows,),
            in_specs=[pl.BlockSpec((tile_rows, _LANE), lambda i, t: (i, 0))],
            out_specs=pl.BlockSpec((tile_rows, _LANE), lambda i, t: (i, 0)),
        ),
        compiler_params=pltpu.CompilerParams(
            dimension_semantics=("parallel",)),          # megacore split on v7x
    )(thresh, loss_2d)

    return out_2d.reshape(-1)[:n].reshape(orig_shape)


def _select_tile_rows(rows, packing):
    sub = _SUBLANE * packing
    if rows <= _SINGLE_BLOCK_ROWS:
        # Tiny per-batch loss: one block, no pipeline / grid-step overhead.
        return rows
    if rows <= 2 * _TILE_ROWS:
        # Mid-size: split roughly in half so both v7x TensorCores get a block.
        return min(_TILE_ROWS, _round_up(pl.cdiv(rows, 2), sub))
    return _TILE_ROWS


def threshold_mask(loss, threshold, *, tile_rows=None):
    """mask = (loss < threshold).astype(loss.dtype), computed on TPU via Pallas.

    `threshold` may be a Python float or a device scalar / (1,) array (no sync).
    """
    packing = _packing(loss.dtype)
    n = max(int(loss.size), 1)
    rows = _round_up(n, _SUBLANE * packing * _LANE) // _LANE
    if tile_rows is None:
        tile_rows = _select_tile_rows(rows, packing)
    thresh = jnp.asarray(threshold, dtype=jnp.float32).reshape(1)
    return _threshold_mask_jit(loss, thresh, tile_rows=int(tile_rows))


# ---------------------------------------------------------------------------
# Device-side helpers for the stateful bookkeeping (no D2H round trips).
# ---------------------------------------------------------------------------
@jax.jit
def _passthrough(loss):
    # (loss < inf) is all-ones except NaN -> 0, matching the reference.
    return (loss < jnp.inf).astype(loss.dtype)


@jax.jit
def _circular_write(vals, tail, start):
    # Write `tail` into `vals` starting at `start`, wrapping around. Equivalent
    # to the reference's per-element loop, done as one scatter on device.
    L = vals.shape[0]
    idx = (start + jnp.arange(tail.shape[0], dtype=jnp.int32)) % L
    return vals.at[idx].set(tail.astype(vals.dtype))


# ---------------------------------------------------------------------------
# Stateful wrapper mirroring the PyTorch LossDropper semantics.
# ---------------------------------------------------------------------------
class LossDropper:
    # NOTE: count / cur_idx / last_computed are host-side Python ints, so this
    # wrapper is for eager use (not inside a jitted/scanned training step).
    def __init__(self, dropc=0.1, min_count=10000, recompute=10000, verbose=True):
        self.keepc = 1.0 - dropc
        self.count = 0
        self.min_count = min_count
        self.recompute = recompute
        self.last_computed = 0
        self.percentile_val = jnp.full((1,), 1e9, dtype=jnp.float32)  # device scalar
        self.cur_idx = 0
        self.verbose = verbose
        self.vals = jnp.zeros(self.recompute, dtype=jnp.float32)      # device buffer

    def __call__(self, loss):
        if loss is None:
            return loss
        # TODO(synk): the reference iterates `enumerate(loss)` un-flattened; we
        # treat the loss as a flat vector of per-example losses (the only case
        # where the reference's per-element buffer write is well formed).
        flat = loss.reshape(-1)
        numel = int(flat.shape[0])
        L = int(self.vals.shape[0])

        self.last_computed += numel
        self.count += numel

        if self.count < L:
            # Fill phase: stash losses contiguously, pass everything through.
            start = self.count - numel
            self.vals = _circular_write(self.vals, flat, start)
            self.cur_idx += numel
            return _passthrough(loss)
        else:
            # Circular-buffer phase: one device scatter handles the wrap.
            m = min(numel, L)
            tail = flat if m == numel else flat[numel - m:]
            start = (self.cur_idx + (numel - m)) % L
            self.vals = _circular_write(self.vals, tail, start)
            self.cur_idx = (self.cur_idx + numel) % L

        if self.count < self.min_count:
            return _passthrough(loss)

        if self.last_computed > self.recompute:
            # TODO(synk): percentile is a sort/quantile -- no clean Pallas
            # equivalent; computed on device with jnp.quantile (XLA sort).
            self.percentile_val = jnp.quantile(
                self.vals, self.keepc).astype(jnp.float32).reshape(1)
            if self.verbose:
                # TODO(synk): this forces a blocking D2H sync every recompute
                # interval; keep verbose=False in hot training loops.
                print('Using cutoff', float(self.percentile_val[0]))
                print(loss)
            self.last_computed = 0

        return threshold_mask(loss, self.percentile_val)


# ---------------------------------------------------------------------------
# Reference (pure numpy) mirroring the torch module exactly, for checking.
# ---------------------------------------------------------------------------
class _RefLossDropper:
    def __init__(self, dropc=0.1, min_count=10000, recompute=10000):
        self.keepc = 1.0 - dropc
        self.count = 0
        self.min_count = min_count
        self.recompute = recompute
        self.last_computed = 0
        self.percentile_val = 1000000000.0
        self.cur_idx = 0
        self.vals = np.zeros(self.recompute, dtype=np.float32)

    def __call__(self, loss_np):
        numel = loss_np.size
        self.last_computed += numel
        self.count += numel
        if self.count < len(self.vals):
            self.vals[self.count - numel:self.count] = loss_np
            self.cur_idx += numel
            return (loss_np < np.inf).astype(loss_np.dtype)
        else:
            for item in loss_np:
                self.vals[self.cur_idx] = item
                self.cur_idx += 1
                if self.cur_idx >= len(self.vals):
                    self.cur_idx = 0
        if self.count < self.min_count:
            return (loss_np < np.inf).astype(loss_np.dtype)
        if self.last_computed > self.recompute:
            self.percentile_val = np.percentile(self.vals, self.keepc * 100)
            self.last_computed = 0
        return (loss_np < self.percentile_val).astype(loss_np.dtype)


if __name__ == "__main__":
    key = jax.random.PRNGKey(0)
    ok = True

    # --- 1) Kernel unit checks -------------------------------------------
    # Single-block path (n=256 -> pad to 1024, rows=8, grid=(1,)).
    key, sub = jax.random.split(key)
    x = jax.random.uniform(sub, (8, 32), dtype=jnp.float32) * 5.0
    got = jax.block_until_ready(threshold_mask(x, 2.5))
    want = (x < 2.5).astype(x.dtype)
    ok &= bool(jnp.all(got == want)) and got.shape == x.shape and got.dtype == x.dtype

    # Tiled path with a partial trailing block (rows=24, tile_rows=16, grid=2).
    key, sub = jax.random.split(key)
    y = jax.random.uniform(sub, (3072,), dtype=jnp.float32) * 5.0
    got = jax.block_until_ready(threshold_mask(y, 2.5, tile_rows=16))
    want = (y < 2.5).astype(y.dtype)
    ok &= bool(jnp.all(got == want))

    # Non-multiple-of-1024 length (exercises the <=1023-element pad path).
    key, sub = jax.random.split(key)
    z = jax.random.uniform(sub, (1000,), dtype=jnp.float32) * 5.0
    got = jax.block_until_ready(threshold_mask(z, 2.5))
    want = (z < 2.5).astype(z.dtype)
    ok &= bool(jnp.all(got == want))

    # bf16 losses (sublane packing = 2); mask values 0/1 are exact in bf16.
    key, sub = jax.random.split(key)
    w = (jax.random.uniform(sub, (2048,), dtype=jnp.float32) * 5.0).astype(jnp.bfloat16)
    got = jax.block_until_ready(threshold_mask(w, 2.5))
    want = (w < 2.5).astype(w.dtype)
    ok &= bool(jnp.all(got == want)) and got.dtype == w.dtype

    # --- 2) Full stateful module vs numpy reference -----------------------
    # Small state so all phases (fill / pass-through / percentile) run.
    dropper = LossDropper(dropc=0.25, min_count=16, recompute=16, verbose=False)
    ref = _RefLossDropper(dropc=0.25, min_count=16, recompute=16)

    N = 8  # per-step loss vector length
    for step in range(4):
        key, sub = jax.random.split(key)
        loss = jax.random.uniform(sub, (N,), dtype=jnp.float32) * 5.0

        mask = jax.block_until_ready(dropper(loss))
        loss_np = np.asarray(jax.device_get(loss), dtype=np.float32)
        mask_ref = ref(loss_np)

        diff = np.asarray(mask) != mask_ref
        if diff.any():
            # Tolerate boundary-ulp differences between jnp.quantile (f32,
            # on device) and np.percentile (f64); any other mismatch is an error.
            thr = float(ref.percentile_val)
            if not np.all(np.abs(loss_np[diff] - thr) <= 1e-5 * max(abs(thr), 1.0)):
                ok = False
                print(f"MISMATCH at step {step}: {np.asarray(mask)} vs {mask_ref}")

    if ok:
        print("KERNEL_OK")
</pallas_src>

<mosaic_0001>
module attributes {stable_mosaic.version = 11 : i64} {
  func.func @_threshold_mask_kernel(%arg0: i32, %arg1: memref<1xf32, #tpu.memory_space<smem>>, %arg2: memref<8x128xf32, #tpu.memory_space<vmem>>, %arg3: memref<8x128xf32, #tpu.memory_space<vmem>>) attributes {dimension_semantics = [#tpu.dimension_semantics<parallel>], iteration_bounds = array<i64: 1>, scalar_prefetch = 1 : i64, scratch_operands = 0 : i64, tpu.core_type = #tpu.core_type<tc>, window_params = [{transform_indices = @transform_0, window_bounds = array<i64: 8, 128>}, {transform_indices = @transform_1, window_bounds = array<i64: 8, 128>}]} {
    %c0 = arith.constant 0 : index
    %0 = memref.load %arg1[%c0] : memref<1xf32, #tpu.memory_space<smem>>
    %c0_0 = arith.constant 0 : index
    %c0_1 = arith.constant 0 : index
    %1 = vector.load %arg2[%c0_0, %c0_1] : memref<8x128xf32, #tpu.memory_space<vmem>>, vector<8x128xf32>
    %2 = vector.broadcast %0 : f32 to vector<8x128xf32>
    %3 = arith.cmpf olt, %1, %2 : vector<8x128xf32>
    %4 = arith.extui %3 : vector<8x128xi1> to vector<8x128xi32>
    %5 = arith.sitofp %4 : vector<8x128xi32> to vector<8x128xf32>
    %c0_2 = arith.constant 0 : index
    %c0_3 = arith.constant 0 : index
    %6 = vector.load %arg3[%c0_2, %c0_3] : memref<8x128xf32, #tpu.memory_space<vmem>>, vector<8x128xf32>
    tpu.vector_store %arg3[%c0_2, %c0_3], %5 {strides = array<i32>} : memref<8x128xf32, #tpu.memory_space<vmem>>, vector<8x128xf32>,
    return
  }
  func.func @transform_0(%arg0: i32, %arg1: memref<1xf32, #tpu.memory_space<smem>>) -> (i32, i32) {
    %c0_i32 = arith.constant 0 : i32
    %c0_i32_0 = arith.constant 0 : i32
    return %arg0, %c0_i32 : i32, i32
  }
  func.func @transform_1(%arg0: i32, %arg1: memref<1xf32, #tpu.memory_space<smem>>) -> (i32, i32) {
    %c0_i32 = arith.constant 0 : i32
    %c0_i32_0 = arith.constant 0 : i32
    return %arg0, %c0_i32 : i32, i32
  }
}

</mosaic_0001>

<llo_original>
// kernel: _threshold_mask_jit.1
$region0: #{_threshold_mask_jit.1}
  #allocation0 [shape = 'u32[]', space=smem, size = 0x4, offset = 0x4, fixed_abs, tag = 'smem constant byte address 0x4 - core index']
  #allocation1 [shape = 'u32[144,128]{1,0:T(1,128)}', space=vmem, size = 0x12000, scoped, tag = 'internal scratch']
  #allocation2 [shape = 's32[1]{0}', space=sflag, size = 0x4, scoped, tag = 'scoped memory for _threshold_mask_jit.1']
  #allocation3 [shape = 'f32[1]{0:T(128)S(6)}', space=smem, size = 0x200, scoped, tag = 'prefetched SMEM operand 0']
  %s0 = inlined_call_operand.<no memory space> [shape: f32[1], index: 0, kind: input, shape index: {}]
  %s1 = inlined_call_operand.vmem [shape: f32[8,128], index: 1, kind: input, shape index: {}]
  %s2 = inlined_call_operand.vmem [shape: f32[8,128], index: 2, kind: output, shape index: {}]
  %s3 = sld [smem:[#allocation0]]
  $region14: #{_threshold_mask_jit.1} parent=0
    _
  %s5 = ssub.s32 1, %s3
  %s6 = scalar_select 0, %s5, %s3
  %7 = sst [smem:[#allocation3]] %s0
  // Predicated region
  $region2: #{_threshold_mask_jit.1} parent=0 // pred_check
    _
  $region3: #{_threshold_mask_jit.1} parent=0 // pred_check_branch
    %9 = sbr.rel (0) target = $region5
  $region4: #{_threshold_mask_jit.1} parent=0 // pred_region
    _
  $region5: #{_threshold_mask_jit.1} parent=0 // pred_fallthru
    _
  %s10 = sld [smem:[#allocation3]]
  %v11 = vld [vmem:[%s1] sm:$0xff]
  %v12 = vstv %s10
  %vm13 = vcmp.lt.f32.partialorder %v11, %v12
  %v14 = vsel %vm13, 1, 0
  %v15 = vcvt.s32.f32 %v14
  %16 = vst [vmem:[%s2] sm:$0xff] %v15
  // Predicated region
  $region6: #{_threshold_mask_jit.1} parent=0 // pred_check
    _
  $region7: #{_threshold_mask_jit.1} parent=0 // pred_check_branch
    %18 = sbr.rel (0) target = $region9
  $region8: #{_threshold_mask_jit.1} parent=0 // pred_region
    _
  $region9: #{_threshold_mask_jit.1} parent=0 // pred_fallthru
    _
  // Predicated region
  $region10: #{_threshold_mask_jit.1} parent=0 // pred_check
    _
  $region11: #{_threshold_mask_jit.1} parent=0 // pred_check_branch
    %20 = sbr.rel (0) target = $region13
  $region12: #{_threshold_mask_jit.1} parent=0 // pred_region
    _
  $region13: #{_threshold_mask_jit.1} parent=0 // pred_fallthru
    _

</llo_original>
